<compile_context>
chip_gen: v7x
topology: tpu7x:2x2x1
jax: 0.10.0
libtpu: 0.0.40
codegen_flags: <defaults>
</compile_context>

<pallas_src>
import jax
import jax.numpy as jnp
from jax.experimental import pallas as pl
from jax.experimental.pallas import tpu as pltpu


# ----------------------------- pass 1: beta ---------------------------------

def _make_beta_kernel(M, tile_n, H, n_valid, needs_mask):
    inv_n = float(1.0 / n_valid)

    def beta_kernel(emb_ref, w_ref, b_ref, att_ref, beta_ref, sp_acc_ref):
        i = pl.program_id(0)

        @pl.when(i == 0)
        def _init():
            sp_acc_ref[...] = jnp.zeros_like(sp_acc_ref)

        # Collapse (M, tile_n, H) -> (M*tile_n, H): one large 2-D MXU matmul.
        emb2d = emb_ref[...].reshape(M * tile_n, H)
        h = jnp.tanh(
            jnp.dot(emb2d, w_ref[...], preferred_element_type=jnp.float32)
            + b_ref[...]                      # (1, H) row-broadcast, hoisted 2-D
        )

        if needs_mask:
            # Zero rows that correspond to padded nodes (only last tile has any).
            row = jax.lax.broadcasted_iota(jnp.int32, (M * tile_n, 1), 0)
            node = i * tile_n + row % tile_n
            h = jnp.where(node < n_valid, h, 0.0)

        # Partial per-view column sums into the resident (M, H) accumulator.
        for m in range(M):
            sp_acc_ref[m:m + 1, :] += jnp.sum(
                h[m * tile_n:(m + 1) * tile_n, :], axis=0, keepdims=True)

        @pl.when(i == pl.num_programs(0) - 1)
        def _finalize():
            sp = sp_acc_ref[...] * inv_n                                  # (M, H)
            # VPU multiply + lane reduce (no width-1 MXU matmul).
            scores = jnp.sum(sp * att_ref[...], axis=-1, keepdims=True)   # (M, 1)
            mmax = jnp.max(scores, axis=0, keepdims=True)
            e = jnp.exp(scores - mmax)
            beta_ref[...] = e / jnp.sum(e, axis=0, keepdims=True)

    return beta_kernel


# ------------------------------ pass 2: z ------------------------------------

def _make_z_kernel(M):
    def z_kernel(beta_ref, emb_ref, z_ref):
        beta = beta_ref[...]                              # (M, 1) resident in VMEM
        # Unrolled per-view scale + add; no (M, ...) broadcast temporary.
        acc = beta[0:1, 0:1] * emb_ref[0:1, :]            # (1, TILE_F) lane-dense
        for m in range(1, M):
            acc = acc + beta[m:m + 1, 0:1] * emb_ref[m:m + 1, :]
        z_ref[...] = acc.astype(z_ref.dtype)

    return z_kernel


# ------------------------------- wrapper -------------------------------------

def attention_forward(embeds, w, b, att, *, max_block_bytes=4 << 20):
    """embeds: (M, N, H) f32; w: (H_out, H_in); b: (1, H); att: (1, H) -> (N, H)."""
    M, N, H = embeds.shape

    # Node-tile size from a VMEM byte budget (conservative for v7x's 64 MiB VMEM).
    bytes_per_node = M * H * 4
    tile_n = max(8, min(N, max_block_bytes // max(bytes_per_node, 1)))
    if tile_n < N:
        tile_n = max(8, (tile_n // 8) * 8)        # keep sublane-aligned tiles
    else:
        tile_n = N
    n_tiles = pl.cdiv(N, tile_n)
    n_pad = n_tiles * tile_n
    needs_mask = n_pad != N

    emb_p = embeds if not needs_mask else jnp.pad(
        embeds, ((0, 0), (0, n_pad - N), (0, 0)))
    w_t = jnp.transpose(w)                        # (H_in, H_out): kernel does x @ w_t

    # NOTE: bf16 casting of emb/w for the MXU (review suggestion) is skipped to
    # preserve exact f32 forward semantics of the PyTorch module.

    cp_seq = pltpu.CompilerParams(
        dimension_semantics=("arbitrary",), vmem_limit_bytes=32 << 20)
    cp_par = pltpu.CompilerParams(
        dimension_semantics=("parallel",), vmem_limit_bytes=32 << 20)

    # ---- pass 1: beta (M, 1) ----
    beta = pl.pallas_call(
        _make_beta_kernel(M, tile_n, H, N, needs_mask),
        out_shape=jax.ShapeDtypeStruct((M, 1), jnp.float32),
        grid=(n_tiles,),
        in_specs=[
            pl.BlockSpec((M, tile_n, H), lambda i: (0, i, 0)),
            pl.BlockSpec((H, H), lambda i: (0, 0)),
            pl.BlockSpec((1, H), lambda i: (0, 0)),
            pl.BlockSpec((1, H), lambda i: (0, 0)),
        ],
        out_specs=pl.BlockSpec((M, 1), lambda i: (0, 0)),
        scratch_shapes=[pltpu.VMEM((M, H), jnp.float32)],
        compiler_params=cp_seq,
    )(emb_p, w_t, b, att)

    # ---- pass 2: z, computed on a lane-dense (M, N*H) view ----
    NH = n_pad * H
    tile_f = tile_n * H
    if tile_f != NH and tile_f % 128 != 0:
        tile_f = NH                               # fallback: one lane-dense slab
    f_tiles = NH // tile_f
    emb_flat = emb_p.reshape(M, NH)

    z_flat = pl.pallas_call(
        _make_z_kernel(M),
        out_shape=jax.ShapeDtypeStruct((1, NH), jnp.float32),
        grid=(f_tiles,),
        in_specs=[
            pl.BlockSpec((M, 1), lambda j: (0, 0)),
            pl.BlockSpec((M, tile_f), lambda j: (0, j)),
        ],
        out_specs=pl.BlockSpec((1, tile_f), lambda j: (0, j)),
        compiler_params=cp_par,
    )(beta, emb_flat)

    return z_flat.reshape(n_pad, H)[:N]


# ------------------------------ reference ------------------------------------

def reference_forward(embeds, w, b, att):
    # Pure-JAX mirror of the PyTorch forward (eval mode, dropout = identity).
    h = jnp.tanh(jnp.einsum("mnh,kh->mnk", embeds, w) + b[None, :, :])
    sp = h.mean(axis=1)                                   # (M, H)
    scores = (sp * att).sum(axis=-1)                      # (M,)
    beta = jax.nn.softmax(scores)                         # (M,)
    return jnp.einsum("m,mnh->nh", beta, embeds)


if __name__ == "__main__":
    # Module hyper-params (synthetic, deterministic init).
    M, N, H = 3, 8, 32      # 3 metapath views, 8 nodes, hidden_dim = 32
    gain = 1.414

    key = jax.random.PRNGKey(0)
    k_emb, k_w, k_b, k_att = jax.random.split(key, 4)

    embeds = jax.random.normal(k_emb, (M, N, H), dtype=jnp.float32)

    # xavier_normal_(fc.weight, gain=1.414): std = gain * sqrt(2 / (fan_in + fan_out))
    w = jax.random.normal(k_w, (H, H), dtype=jnp.float32) * (gain * (2.0 / (H + H)) ** 0.5)
    b = (jax.random.uniform(k_b, (1, H), dtype=jnp.float32) - 0.5) * (2.0 / H ** 0.5)
    # xavier_normal_(att, gain=1.414) on shape (1, H)
    att = jax.random.normal(k_att, (1, H), dtype=jnp.float32) * (gain * (2.0 / (1 + H)) ** 0.5)

    # TODO(synk): attn_drop (Dropout on `att`) is identity here (inference / attn_drop=0).

    z = attention_forward(embeds, w, b, att)
    z = jax.block_until_ready(z)

    z_ref = reference_forward(embeds, w, b, att)
    assert z.shape == (N, H)
    assert jnp.allclose(z, z_ref, atol=1e-5, rtol=1e-5), "Pallas kernel mismatch vs reference"

    print("KERNEL_OK")
</pallas_src>

<mosaic_0001>
module attributes {stable_mosaic.version = 11 : i64} {
  func.func @beta_kernel(%arg0: i32, %arg1: memref<3x8x32xf32, #tpu.memory_space<vmem>>, %arg2: memref<32x32xf32, #tpu.memory_space<vmem>>, %arg3: memref<1x32xf32, #tpu.memory_space<vmem>>, %arg4: memref<1x32xf32, #tpu.memory_space<vmem>>, %arg5: memref<3x1xf32, #tpu.memory_space<vmem>>, %arg6: memref<3x32xf32, #tpu.memory_space<vmem>>) attributes {dimension_semantics = [#tpu.dimension_semantics<arbitrary>], iteration_bounds = array<i64: 1>, scalar_prefetch = 0 : i64, scratch_operands = 1 : i64, tpu.core_type = #tpu.core_type<tc>, window_params = [{transform_indices = @transform_0, window_bounds = array<i64: 3, 8, 32>}, {pipeline_mode = #tpu.pipeline_mode<synchronous>, transform_indices = @transform_1, window_bounds = array<i64: 32, 32>}, {pipeline_mode = #tpu.pipeline_mode<synchronous>, transform_indices = @transform_2, window_bounds = array<i64: 1, 32>}, {pipeline_mode = #tpu.pipeline_mode<synchronous>, transform_indices = @transform_3, window_bounds = array<i64: 1, 32>}, {pipeline_mode = #tpu.pipeline_mode<synchronous>, transform_indices = @transform_4, window_bounds = array<i64: 3, 1>}]} {
    %c0_i32 = arith.constant 0 : i32
    %0 = arith.cmpi eq, %arg0, %c0_i32 : i32
    %1 = arith.extui %0 : i1 to i32
    %c0_i32_0 = arith.constant 0 : i32
    %2 = arith.cmpi ne, %1, %c0_i32_0 : i32
    scf.if %2 {
      %cst_22 = arith.constant 0.000000e+00 : f32
      %32 = vector.broadcast %cst_22 : f32 to vector<3x32xf32>
      %c0_23 = arith.constant 0 : index
      %c0_24 = arith.constant 0 : index
      %33 = vector.load %arg6[%c0_23, %c0_24] : memref<3x32xf32, #tpu.memory_space<vmem>>, vector<3x32xf32>
      tpu.vector_store %arg6[%c0_23, %c0_24], %32 {strides = array<i32>} : memref<3x32xf32, #tpu.memory_space<vmem>>, vector<3x32xf32>,
    } else {
    }
    %c0 = arith.constant 0 : index
    %c0_1 = arith.constant 0 : index
    %c0_2 = arith.constant 0 : index
    %3 = vector.load %arg1[%c0, %c0_1, %c0_2] : memref<3x8x32xf32, #tpu.memory_space<vmem>>, vector<3x8x32xf32>
    %4 = vector.shape_cast %3 : vector<3x8x32xf32> to vector<24x32xf32>
    %c0_3 = arith.constant 0 : index
    %c0_4 = arith.constant 0 : index
    %5 = vector.load %arg2[%c0_3, %c0_4] : memref<32x32xf32, #tpu.memory_space<vmem>>, vector<32x32xf32>
    %cst = arith.constant dense<0.000000e+00> : vector<24x32xf32>
    %6 = tpu.matmul %4, %5, %cst {dimension_numbers = #tpu.dot_dimension_numbers<[1], [0], [0], [1], [0, 0, 1, 1], [], []>} : vector<24x32xf32>, vector<32x32xf32>, vector<24x32xf32> -> vector<24x32xf32>
    %c0_5 = arith.constant 0 : index
    %c0_6 = arith.constant 0 : index
    %7 = vector.load %arg3[%c0_5, %c0_6] : memref<1x32xf32, #tpu.memory_space<vmem>>, vector<1x32xf32>
    %8 = vector.broadcast %7 : vector<1x32xf32> to vector<24x32xf32>
    %9 = arith.addf %6, %8 : vector<24x32xf32>
    %10 = math.tanh %9 : vector<24x32xf32>
    %c0_7 = arith.constant 0 : index
    %c0_8 = arith.constant 0 : index
    %11 = vector.load %arg6[%c0_7, %c0_8] : memref<3x32xf32, #tpu.memory_space<vmem>>, vector<1x32xf32>
    %12 = vector.extract_strided_slice %10 {offsets = [0, 0], sizes = [8, 32], strides = [1, 1]} : vector<24x32xf32> to vector<8x32xf32>
    %cst_9 = arith.constant dense<0.000000e+00> : vector<32xf32>
    %13 = vector.multi_reduction <add>, %12, %cst_9 [0] : vector<8x32xf32> to vector<32xf32>
    %14 = vector.shape_cast %13 : vector<32xf32> to vector<1x32xf32>
    %15 = arith.addf %11, %14 : vector<1x32xf32>
    %c0_10 = arith.constant 0 : index
    %c0_11 = arith.constant 0 : index
    %16 = vector.load %arg6[%c0_10, %c0_11] : memref<3x32xf32, #tpu.memory_space<vmem>>, vector<1x32xf32>
    tpu.vector_store %arg6[%c0_10, %c0_11], %15 {strides = array<i32>} : memref<3x32xf32, #tpu.memory_space<vmem>>, vector<1x32xf32>,
    %c1 = arith.constant 1 : index
    %c0_12 = arith.constant 0 : index
    %17 = vector.load %arg6[%c1, %c0_12] : memref<3x32xf32, #tpu.memory_space<vmem>>, vector<1x32xf32>
    %18 = vector.extract_strided_slice %10 {offsets = [8, 0], sizes = [8, 32], strides = [1, 1]} : vector<24x32xf32> to vector<8x32xf32>
    %cst_13 = arith.constant dense<0.000000e+00> : vector<32xf32>
    %19 = vector.multi_reduction <add>, %18, %cst_13 [0] : vector<8x32xf32> to vector<32xf32>
    %20 = vector.shape_cast %19 : vector<32xf32> to vector<1x32xf32>
    %21 = arith.addf %17, %20 : vector<1x32xf32>
    %c1_14 = arith.constant 1 : index
    %c0_15 = arith.constant 0 : index
    %22 = vector.load %arg6[%c1_14, %c0_15] : memref<3x32xf32, #tpu.memory_space<vmem>>, vector<1x32xf32>
    tpu.vector_store %arg6[%c1_14, %c0_15], %21 {strides = array<i32>} : memref<3x32xf32, #tpu.memory_space<vmem>>, vector<1x32xf32>,
    %c2 = arith.constant 2 : index
    %c0_16 = arith.constant 0 : index
    %23 = vector.load %arg6[%c2, %c0_16] : memref<3x32xf32, #tpu.memory_space<vmem>>, vector<1x32xf32>
    %24 = vector.extract_strided_slice %10 {offsets = [16, 0], sizes = [8, 32], strides = [1, 1]} : vector<24x32xf32> to vector<8x32xf32>
    %cst_17 = arith.constant dense<0.000000e+00> : vector<32xf32>
    %25 = vector.multi_reduction <add>, %24, %cst_17 [0] : vector<8x32xf32> to vector<32xf32>
    %26 = vector.shape_cast %25 : vector<32xf32> to vector<1x32xf32>
    %27 = arith.addf %23, %26 : vector<1x32xf32>
    %c2_18 = arith.constant 2 : index
    %c0_19 = arith.constant 0 : index
    %28 = vector.load %arg6[%c2_18, %c0_19] : memref<3x32xf32, #tpu.memory_space<vmem>>, vector<1x32xf32>
    tpu.vector_store %arg6[%c2_18, %c0_19], %27 {strides = array<i32>} : memref<3x32xf32, #tpu.memory_space<vmem>>, vector<1x32xf32>,
    %c0_i32_20 = arith.constant 0 : i32
    %29 = arith.cmpi eq, %arg0, %c0_i32_20 : i32
    %30 = arith.extui %29 : i1 to i32
    %c0_i32_21 = arith.constant 0 : i32
    %31 = arith.cmpi ne, %30, %c0_i32_21 : i32
    scf.if %31 {
      %c0_22 = arith.constant 0 : index
      %c0_23 = arith.constant 0 : index
      %32 = vector.load %arg6[%c0_22, %c0_23] : memref<3x32xf32, #tpu.memory_space<vmem>>, vector<3x32xf32>
      %cst_24 = arith.constant 1.250000e-01 : f32
      %33 = vector.broadcast %cst_24 : f32 to vector<3x32xf32>
      %34 = arith.mulf %32, %33 : vector<3x32xf32>
      %c0_25 = arith.constant 0 : index
      %c0_26 = arith.constant 0 : index
      %35 = vector.load %arg4[%c0_25, %c0_26] : memref<1x32xf32, #tpu.memory_space<vmem>>, vector<1x32xf32>
      %36 = vector.broadcast %35 : vector<1x32xf32> to vector<3x32xf32>
      %37 = arith.mulf %34, %36 : vector<3x32xf32>
      %cst_27 = arith.constant dense<0.000000e+00> : vector<3xf32>
      %38 = vector.multi_reduction <add>, %37, %cst_27 [1] : vector<3x32xf32> to vector<3xf32>
      %39 = vector.shape_cast %38 : vector<3xf32> to vector<3x1xf32>
      %cst_28 = arith.constant dense<0xFF800000> : vector<1xf32>
      %40 = vector.multi_reduction <maximumf>, %39, %cst_28 [0] : vector<3x1xf32> to vector<1xf32>
      %41 = vector.shape_cast %40 : vector<1xf32> to vector<1x1xf32>
      %42 = vector.broadcast %41 : vector<1x1xf32> to vector<3x1xf32>
      %43 = arith.subf %39, %42 : vector<3x1xf32>
      %44 = math.exp %43 : vector<3x1xf32>
      %cst_29 = arith.constant dense<0.000000e+00> : vector<1xf32>
      %45 = vector.multi_reduction <add>, %44, %cst_29 [0] : vector<3x1xf32> to vector<1xf32>
      %46 = vector.shape_cast %45 : vector<1xf32> to vector<1x1xf32>
      %47 = vector.broadcast %46 : vector<1x1xf32> to vector<3x1xf32>
      %48 = arith.divf %44, %47 : vector<3x1xf32>
      %c0_30 = arith.constant 0 : index
      %c0_31 = arith.constant 0 : index
      %49 = vector.load %arg5[%c0_30, %c0_31] : memref<3x1xf32, #tpu.memory_space<vmem>>, vector<3x1xf32>
      tpu.vector_store %arg5[%c0_30, %c0_31], %48 {strides = array<i32>} : memref<3x1xf32, #tpu.memory_space<vmem>>, vector<3x1xf32>,
    } else {
    }
    return
  }
  func.func @transform_0(%arg0: i32) -> (i32, i32, i32) {
    %c0_i32 = arith.constant 0 : i32
    %c0_i32_0 = arith.constant 0 : i32
    %c0_i32_1 = arith.constant 0 : i32
    return %c0_i32, %arg0, %c0_i32_0 : i32, i32, i32
  }
  func.func @transform_1(%arg0: i32) -> (i32, i32) {
    %c0_i32 = arith.constant 0 : i32
    %c0_i32_0 = arith.constant 0 : i32
    %c0_i32_1 = arith.constant 0 : i32
    return %c0_i32, %c0_i32_0 : i32, i32
  }
  func.func @transform_2(%arg0: i32) -> (i32, i32) {
    %c0_i32 = arith.constant 0 : i32
    %c0_i32_0 = arith.constant 0 : i32
    %c0_i32_1 = arith.constant 0 : i32
    return %c0_i32, %c0_i32_0 : i32, i32
  }
  func.func @transform_3(%arg0: i32) -> (i32, i32) {
    %c0_i32 = arith.constant 0 : i32
    %c0_i32_0 = arith.constant 0 : i32
    %c0_i32_1 = arith.constant 0 : i32
    return %c0_i32, %c0_i32_0 : i32, i32
  }
  func.func @transform_4(%arg0: i32) -> (i32, i32) {
    %c0_i32 = arith.constant 0 : i32
    %c0_i32_0 = arith.constant 0 : i32
    %c0_i32_1 = arith.constant 0 : i32
    return %c0_i32, %c0_i32_0 : i32, i32
  }
}

</mosaic_0001>

<llo_original>
// kernel: tpu_custom_call.1
$region0: #{tpu_custom_call.1}
  #allocation0 [shape = 'u32[]', space=smem, size = 0x4, offset = 0x4, fixed_abs, tag = 'smem constant byte address 0x4 - core index']
  #allocation1 [shape = 'u32[144,128]{1,0:T(1,128)}', space=vmem, size = 0x12000, scoped, tag = 'internal scratch']
  #allocation2 [shape = 'f32[3,32]{1,0:T(4,128)}', space=vmem, size = 0x800, scoped, tag = 'scratch operand']
  %s0 = inlined_call_operand.hbm [shape: f32[3,8,32], index: 0, kind: input, shape index: {}]
  %s1 = inlined_call_operand.hbm [shape: f32[32,32], index: 1, kind: input, shape index: {}]
  %s2 = inlined_call_operand.vmem [shape: f32[1,32], index: 2, kind: input, shape index: {}]
  %s3 = inlined_call_operand.vmem [shape: f32[1,32], index: 3, kind: input, shape index: {}]
  %s4 = inlined_call_operand.vmem [shape: f32[3,1], index: 4, kind: output, shape index: {}]
  %s5 = sld [smem:[#allocation0]]
  $region42: #{tpu_custom_call.1} parent=0
    _
  %s7 = ssub.s32 1, %s5
  %s8 = scalar_select 0, %s7, %s5
  $region1: #{tpu_custom_call.1} parent=0
    #allocation3 [shape = 'u8[12288]{0}', space=vmem, size = 0x3000, scoped, tag = 'input window, operand 0, single buffered']
    #allocation4 [shape = 's32[1]{0}', space=sflag, size = 0x4, scoped, tag = 'scoped memory for tpu_custom_call.1']
    #allocation5 [shape = 'u8[16384]{0}', space=vmem, size = 0x4000, scoped, tag = 'input window, operand 1, single buffered']
    #allocation6 [shape = 's32[1]{0}', space=sflag, size = 0x4, scoped, tag = 'scoped memory for tpu_custom_call.1']
    %9 = vsyncpa [#allocation4], 0
    %10 = vsyncpa [#allocation6], 0
    // Predicated region
    $region2: #{tpu_custom_call.1} parent=1 // pred_check
      _
    $region3: #{tpu_custom_call.1} parent=1 // pred_check_branch
      %12 = sbr.rel (0) target = $region5
    $region4: #{tpu_custom_call.1} parent=1 // pred_region
      %s14 = ssub.s32 384, 384
      %15 = vsyncadd [#allocation4], %s14
      %s16 = sshll.u32 [#allocation3], 4
      %s17 = int_to_ptr.vmem [resolvable:$true] %s16
      %22 = dma.hbm_to_vmem [thread:$0]  %s0, 384, %s17, [#allocation4], 128, 128, 8
    $region5: #{tpu_custom_call.1} parent=1 // pred_fallthru
      _
    // Predicated region
    $region6: #{tpu_custom_call.1} parent=1 // pred_check
      _
    $region7: #{tpu_custom_call.1} parent=1 // pred_check_branch
      %24 = sbr.rel (0) target = $region9
    $region8: #{tpu_custom_call.1} parent=1 // pred_region
      %s26 = ssub.s32 512, 512
      %27 = vsyncadd [#allocation6], %s26
      %s28 = sshll.u32 [#allocation5], 4
      %s29 = int_to_ptr.vmem [resolvable:$true] %s28
      %34 = dma.hbm_to_vmem [thread:$0]  %s1, 512, %s29, [#allocation6], 128, 128, 8
    $region9: #{tpu_custom_call.1} parent=1 // pred_fallthru
      _
    // Predicated region
    $region10: #{tpu_custom_call.1} parent=1 // pred_check
      _
    $region11: #{tpu_custom_call.1} parent=1 // pred_check_branch
      %36 = sbr.rel (0) target = $region13
    $region12: #{tpu_custom_call.1} parent=1 // pred_region
      _
    $region13: #{tpu_custom_call.1} parent=1 // pred_fallthru
      _
    // Predicated region
    $region14: #{tpu_custom_call.1} parent=1 // pred_check
      _
    $region15: #{tpu_custom_call.1} parent=1 // pred_check_branch
      %38 = sbr.rel (0) target = $region17
    $region16: #{tpu_custom_call.1} parent=1 // pred_region
      _
    $region17: #{tpu_custom_call.1} parent=1 // pred_fallthru
      _
    // Predicated region
    $region18: #{tpu_custom_call.1} parent=1 // pred_check
      _
    $region19: #{tpu_custom_call.1} parent=1 // pred_check_branch
      %40 = sbr.rel (0) target = $region21
    $region20: #{tpu_custom_call.1} parent=1 // pred_region
      %41 = dma.done [#allocation4], 384
    $region21: #{tpu_custom_call.1} parent=1 // pred_fallthru
      _
    // Predicated region
    $region22: #{tpu_custom_call.1} parent=1 // pred_check
      _
    $region23: #{tpu_custom_call.1} parent=1 // pred_check_branch
      %43 = sbr.rel (0) target = $region25
    $region24: #{tpu_custom_call.1} parent=1 // pred_region
      %44 = dma.done [#allocation6], 512
    $region25: #{tpu_custom_call.1} parent=1 // pred_fallthru
      _
    %p45 = scmp.eq.s32.totalorder 0, 0
    // Predicated region
    $region26: #{tpu_custom_call.1} parent=1 // pred_check
      %p46 = pneg %p45
    $region27: #{tpu_custom_call.1} parent=1 // pred_check_branch
      %48 = sbr.rel (%p46) target = $region29
    $region28: #{tpu_custom_call.1} parent=1 // pred_region
      %vm49 = vcmask 256000
      %50 = vst.msk [vmem:[#allocation2] sm:$0x7] %vm49, 0.0
    $region29: #{tpu_custom_call.1} parent=1 // pred_fallthru
      _
    %v51 = vld [vmem:[#allocation3] sm:$0xff]
    %v52 = vld [vmem:[#allocation3 + $0x8] sm:$0xff]
    %v53 = vld [vmem:[#allocation3 + $0x10] sm:$0xff]
    %v54 = vld [vmem:[#allocation5] sm:$0xff]
    %v55 = vld [vmem:[#allocation5 + $0x8] sm:$0xff]
    %v56 = vld [vmem:[#allocation5 + $0x10] sm:$0xff]
    %v57 = vld [vmem:[#allocation5 + $0x18] sm:$0xff]
    %v58 = vld [vmem:[%s2] sm:$0x1]
    %v60 = vlaneseq
    %v61 = vshrl.u32 %v60, 7
    %v62 = vsub.s32 0, %v61
    %v63 = vrot.slane %v58, %v62
    %vm65 = vcmask 261120
    %v67 = vsel %vm65, %v51, 0
    %v70 = vsel %vm65, %v52, 0
    %v73 = vsel %vm65, %v53, 0
    %75 = vmatprep.subr.mxu0 0.0
    %76 = vmatpush1.msra.mxu0 %v54
    %77 = vmatprep.subr.mxu0 0.0
    %78 = vmatpush1.msra.mxu0 %v55
    %79 = vmatprep.subr.mxu0 0.0
    %80 = vmatpush1.msra.mxu0 %v56
    %81 = vmatprep.subr.mxu0 0.0
    %82 = vmatpush1.msra.mxu0 %v57
    %83 = vmatprep.subr.mxu0 0.0
    %84 = vmatpush1.msra.mxu0 0.0
    %85 = vmatprep.subr.mxu0 0.0
    %86 = vmatpush1.msra.mxu0 0.0
    %87 = vmatprep.subr.mxu0 0.0
    %88 = vmatpush1.msra.mxu0 0.0
    %89 = vmatprep.subr.mxu0 0.0
    %90 = vmatpush1.msra.mxu0 0.0
    %91 = vmatprep.subr.mxu0 0.0
    %92 = vmatpush1.msra.mxu0 0.0
    %93 = vmatprep.subr.mxu0 0.0
    %94 = vmatpush1.msra.mxu0 0.0
    %95 = vmatprep.subr.mxu0 0.0
    %96 = vmatpush1.msra.mxu0 0.0
    %97 = vmatprep.subr.mxu0 0.0
    %98 = vmatpush1.msra.mxu0 0.0
    %99 = vmatprep.subr.mxu0 0.0
    %100 = vmatpush1.msra.mxu0 0.0
    %101 = vmatprep.subr.mxu0 0.0
    %102 = vmatpush1.msra.mxu0 0.0
    %103 = vmatprep.subr.mxu0 0.0
    %104 = vmatpush1.msra.mxu0 0.0
    %105 = vmatprep.subr.mxu0 0.0
    %106 = vmatpush1.msra.mxu0 0.0
    %107 = vmatprep.subr.mxu0 0.0
    %108 = vmatpush1.msra.mxu0 0.0
    %109 = vmatprep.subr.mxu0 0.0
    %110 = vmatpush1.msra.mxu0 0.0
    %111 = vmatprep.subr.mxu0 0.0
    %112 = vmatpush1.msra.mxu0 0.0
    %113 = vmatprep.subr.mxu0 0.0
    %114 = vmatpush1.msra.mxu0 0.0
    %115 = vmatprep.subr.mxu0 0.0
    %116 = vmatpush1.msra.mxu0 0.0
    %117 = vmatprep.subr.mxu0 0.0
    %118 = vmatpush1.msra.mxu0 0.0
    %119 = vmatprep.subr.mxu0 0.0
    %120 = vmatpush1.msra.mxu0 0.0
    %121 = vmatprep.subr.mxu0 0.0
    %122 = vmatpush1.msra.mxu0 0.0
    %123 = vmatprep.subr.mxu0 0.0
    %124 = vmatpush1.msra.mxu0 0.0
    %125 = vmatprep.subr.mxu0 0.0
    %126 = vmatpush1.msra.mxu0 0.0
    %127 = vmatprep.subr.mxu0 0.0
    %128 = vmatpush1.msra.mxu0 0.0
    %129 = vmatprep.subr.mxu0 0.0
    %130 = vmatpush1.msra.mxu0 0.0
    %131 = vmatprep.subr.mxu0 0.0
    %132 = vmatpush1.msra.mxu0 0.0
    %133 = vmatprep.subr.mxu0 0.0
    %134 = vmatpush1.msra.mxu0 0.0
    %135 = vmatprep.subr.mxu0 0.0
    %136 = vmatpush1.msra.mxu0 0.0
    %137 = vmatprep.subr.mxu0 0.0
    %138 = vmatpush1.msra.mxu0 0.0
    %139 = vmatprep.mubr.f32.mxu0 0.0
    %140 = vmatmul.mubr.f32.gmra.mrb[0].mxu0 %v67
    %v141 = vpop.f32.mrb[0].mxu0
    %v142 = vadd.f32 %v63, %v141
    %v143 = vpop.f32.mrb[0].mxu0
    %144 = vmatprep.mubr.f32.mxu0 0.0
    %145 = vmatmul.mubr.f32.gmra.mrb[0].mxu0 %v70
    %v146 = vpop.f32.mrb[0].mxu0
    %v147 = vadd.f32 %v63, %v146
    %v148 = vpop.f32.mrb[0].mxu0
    %149 = vmatprep.mubr.f32.mxu0 0.0
    %150 = vmatmul.mubr.f32.gmra.mrb[0].mxu0 %v73
    %v151 = vpop.f32.mrb[0].mxu0
    %v152 = vadd.f32 %v63, %v151
    %v153 = vpop.f32.mrb[0].mxu0
    %154 = vdwg.mxu0
    %v155 = vtanh.pop %v142
    %v156 = vtanh.pop %v147
    %v157 = vtanh.pop %v152
    %v158 = vld [vmem:[#allocation2] sm:$0x1]
    %v159 = vsel %vm65, %v155, 0.0
    %v160 = vrot.slane %v159, 4
    %v161 = vadd.f32 %v159, %v160
    %v162 = vrot.slane %v161, 2
    %v163 = vadd.f32 %v161, %v162
    %v164 = vrot.slane %v163, 1
    %v165 = vadd.f32 %v163, %v164
    %v166 = vadd.f32 %v158, %v165
    %vm167 = vcmask 253952
    %168 = vst.msk [vmem:[#allocation2] sm:$0x1] %vm167, %v166
    %v169 = vld [vmem:[#allocation2 + $0x1] sm:$0x1]
    %v170 = vsel %vm65, %v156, 0.0
    %v171 = vrot.slane %v170, 4
    %v172 = vadd.f32 %v170, %v171
    %v173 = vrot.slane %v172, 2
    %v174 = vadd.f32 %v172, %v173
    %v175 = vrot.slane %v174, 1
    %v176 = vadd.f32 %v174, %v175
    %v177 = vadd.f32 %v169, %v176
    %178 = vst.msk [vmem:[#allocation2 + $0x1] sm:$0x1] %vm167, %v177
    %v179 = vld [vmem:[#allocation2 + $0x2] sm:$0x1]
    %v180 = vsel %vm65, %v157, 0.0
    %v181 = vrot.slane %v180, 4
    %v182 = vadd.f32 %v180, %v181
    %v183 = vrot.slane %v182, 2
    %v184 = vadd.f32 %v182, %v183
    %v185 = vrot.slane %v184, 1
    %v186 = vadd.f32 %v184, %v185
    %v187 = vadd.f32 %v179, %v186
    %188 = vst.msk [vmem:[#allocation2 + $0x2] sm:$0x1] %vm167, %v187
    // Predicated region
    $region30: #{tpu_custom_call.1} parent=1 // pred_check
      %p189 = pneg %p45
    $region31: #{tpu_custom_call.1} parent=1 // pred_check_branch
      %191 = sbr.rel (%p189) target = $region33
    $region32: #{tpu_custom_call.1} parent=1 // pred_region
      %v192 = vld [vmem:[#allocation2] sm:$0x7]
      %v193 = vmul.f32 %v192, 0.125
      %v194 = vld [vmem:[%s3] sm:$0x1]
      %v196 = vlaneseq
      %v197 = vshrl.u32 %v196, 7
      %v198 = vsub.s32 0, %v197
      %v199 = vrot.slane %v194, %v198
      %v201 = vmul.f32 %v193, %v199
      %vm202 = vcmask 256000
      %v203 = vsel %vm202, %v201, 0.0
      %204 = vadd.xlane.f32.xlu0 %v203
      %v205 = vpop.xlane.xlu0 %204
      %vm206 = vcmask 1042432
      %v207 = vsel %vm206, %v205, -inf
      %v208 = vrot.slane %v207, 4
      %v209 = vmax.f32 %v207, %v208
      %v210 = vrot.slane %v209, 2
      %v211 = vmax.f32 %v209, %v210
      %v212 = vrot.slane %v211, 1
      %v213 = vmax.f32 %v211, %v212
      %v214 = vsub.f32 %v205, %v213
      %v215 = vmul.f32 %v214, 1.442695
      %v216 = vpow.pop %v215
      %v217 = vsel %vm206, %v216, 0.0
      %v218 = vrot.slane %v217, 4
      %v219 = vadd.f32 %v217, %v218
      %v220 = vrot.slane %v219, 2
      %v221 = vadd.f32 %v219, %v220
      %v222 = vrot.slane %v221, 1
      %v223 = vadd.f32 %v221, %v222
      %v224 = vrcp.pop %v223
      %v225 = vmul.f32 %v216, %v224
      %vm226 = vcmask 2048
      %227 = vst.msk [vmem:[%s4] sm:$0x7] %vm226, %v225
    $region33: #{tpu_custom_call.1} parent=1 // pred_fallthru
      _
    // Predicated region
    $region34: #{tpu_custom_call.1} parent=1 // pred_check
      _
    $region35: #{tpu_custom_call.1} parent=1 // pred_check_branch
      %229 = sbr.rel (0) target = $region37
    $region36: #{tpu_custom_call.1} parent=1 // pred_region
      _
    $region37: #{tpu_custom_call.1} parent=1 // pred_fallthru
      _
    // Predicated region
    $region38: #{tpu_custom_call.1} parent=1 // pred_check
      _
    $region39: #{tpu_custom_call.1} parent=1 // pred_check_branch
      %231 = sbr.rel (0) target = $region41
    $region40: #{tpu_custom_call.1} parent=1 // pred_region
      _
    $region41: #{tpu_custom_call.1} parent=1 // pred_fallthru
      _
    %232 = vsyncpa [#allocation4], 1
    %233 = vsyncpa [#allocation6], 1

</llo_original>
